<compile_context>
chip_gen: v6e
topology: v6e:2x2x1
jax: 0.10.0
libtpu: 0.0.40
codegen_flags: <defaults>
</compile_context>

<pallas_src>
import functools

import jax
import jax.numpy as jnp
from jax.experimental import pallas as pl
from jax.experimental.pallas import tpu as pltpu


def _round_up(a, b):
    return ((a + b - 1) // b) * b


def _conv_block(xwin, wd, bd, w1, b1, *, dilation, kernel_size, tile_t,
                compute_dtype):
    """Fused dilated-conv -> bias+ReLU -> 1x1-conv -> bias -> +residual.

    xwin : (C_in, tile_t + 2*dilation)  zero-padded halo window, f32
    wd   : (C_out, K*C_in)              fused dilated-conv weights (compute_dtype)
    bd   : (C_out, 1)                   dilated-conv bias (f32)
    w1   : (C_out, C_out)               1x1-conv weights (compute_dtype)
    b1   : (C_out, 1)                   1x1-conv bias (f32)
    returns (C_out, tile_t) f32
    """
    # Fuse the K taps into one matmul: stack the K shifted windows along the
    # channel (sublane) axis -> (K*C_in, tile_t); contraction dim = K*C_in.
    taps = [xwin[:, k * dilation:k * dilation + tile_t]
            for k in range(kernel_size)]
    xs = jnp.concatenate(taps, axis=0).astype(compute_dtype)

    h = jnp.dot(wd, xs, preferred_element_type=jnp.float32)        # MXU
    h = jnp.maximum(h + bd, 0.0)                                    # bias + ReLU, f32

    out = jnp.dot(w1, h.astype(compute_dtype),
                  preferred_element_type=jnp.float32) + b1          # MXU

    # Dropout(0.3) is identity in eval/inference mode.
    # Residual = centre of the halo window (the original, unshifted x tile).
    res = xwin[:, dilation:dilation + tile_t].astype(jnp.float32)
    return out + res


def _resident_kernel(x_ref, wd_ref, bd_ref, w1_ref, b1_ref, o_ref, *,
                     dilation, kernel_size, tile_t, num_t, compute_dtype):
    """Grid step (n, t).  x_ref holds the full padded sequence of batch n,
    resident in VMEM across the inner time-tile axis; the halo window for this
    tile is sliced in-kernel.  o_ref is one (C_out, tile_t) block."""
    win = tile_t + 2 * dilation
    if num_t == 1:
        xwin = x_ref[...]
    else:
        start = pl.program_id(1) * tile_t
        if tile_t % 128 == 0:
            start = pl.multiple_of(start, 128)     # lane-aligned window load
        xwin = x_ref[:, pl.ds(start, win)]
    o_ref[...] = _conv_block(
        xwin, wd_ref[...], bd_ref[...], w1_ref[...], b1_ref[...],
        dilation=dilation, kernel_size=kernel_size, tile_t=tile_t,
        compute_dtype=compute_dtype).astype(o_ref.dtype)


def _halo_kernel(xw_ref, wd_ref, bd_ref, w1_ref, b1_ref, o_ref, *,
                 dilation, kernel_size, tile_t, compute_dtype):
    """Fallback for very long sequences: xw_ref is one wrapper-built halo
    window (C_in, tile_t + 2*dilation) -> VMEM bounded independently of T."""
    o_ref[...] = _conv_block(
        xw_ref[...], wd_ref[...], bd_ref[...], w1_ref[...], b1_ref[...],
        dilation=dilation, kernel_size=kernel_size, tile_t=tile_t,
        compute_dtype=compute_dtype).astype(o_ref.dtype)


def dilated_residual_layer(x_nct, w_dil, b_dil, w_1x1, b_1x1, *, dilation=1,
                           compute_dtype=jnp.bfloat16):
    """x_nct: (N, C_in, T) float32 in PyTorch Conv1d layout. Returns (N, C_out, T)."""
    N, C_in, T = x_nct.shape
    C_out, C_in_w, K = w_dil.shape
    assert C_in == C_in_w and C_in == C_out, "residual add needs d_in == d_out"

    # --- weights: fold the K taps into a single (C_out, K*C_in) matrix -------
    # Column k*C_in + c multiplies tap k of channel c (matches in-kernel stack).
    wd = jnp.transpose(w_dil, (0, 2, 1)).reshape(C_out, K * C_in).astype(compute_dtype)
    w1 = w_1x1[:, :, 0].astype(compute_dtype)              # (C_out, C_out)
    bd = b_dil.reshape(C_out, 1).astype(jnp.float32)
    b1 = b_1x1.reshape(C_out, 1).astype(jnp.float32)

    # --- time tiling ----------------------------------------------------------
    MAX_TILE = 2048                      # lane-dense (multiple of 128) output blocks
    tile_t = T if T <= MAX_TILE else MAX_TILE
    t_pad = _round_up(T, tile_t)
    num_t = t_pad // tile_t
    win = tile_t + 2 * dilation

    itemsize = jnp.dtype(x_nct.dtype).itemsize
    x_block_bytes = C_in * (t_pad + 2 * dilation) * itemsize
    out_block_bytes = C_out * tile_t * itemsize
    # Keep the whole padded sequence resident in VMEM per batch element when it
    # fits (double-buffered).  MSTCN uses C=64 -> holds up to ~45k frames.
    use_resident = x_block_bytes <= (12 << 20)

    # Zero pad: `dilation` left (conv padding), `dilation + tail` right (conv
    # padding + tile remainder).  The padded output tail is sliced off below.
    xp = jnp.pad(x_nct, ((0, 0), (0, 0), (dilation, dilation + (t_pad - T))))

    w_specs = [
        pl.BlockSpec((C_out, K * C_in), lambda n, t: (0, 0)),
        pl.BlockSpec((C_out, 1), lambda n, t: (0, 0)),
        pl.BlockSpec((C_out, C_out), lambda n, t: (0, 0)),
        pl.BlockSpec((C_out, 1), lambda n, t: (0, 0)),
    ]

    if use_resident:
        kernel = functools.partial(
            _resident_kernel, dilation=dilation, kernel_size=K, tile_t=tile_t,
            num_t=num_t, compute_dtype=compute_dtype)
        x_arg = xp
        x_spec = pl.BlockSpec((None, C_in, t_pad + 2 * dilation),
                              lambda n, t: (n, 0, 0))
        semantics = ("parallel", "arbitrary")
        vmem_bytes = 2 * x_block_bytes + 2 * out_block_bytes
    else:
        kernel = functools.partial(
            _halo_kernel, dilation=dilation, kernel_size=K, tile_t=tile_t,
            compute_dtype=compute_dtype)
        # Overlapping halo windows, one per time tile: (N, num_t, C_in, win).
        x_arg = jnp.stack(
            [jax.lax.slice_in_dim(xp, t * tile_t, t * tile_t + win, axis=2)
             for t in range(num_t)], axis=1)
        x_spec = pl.BlockSpec((None, None, C_in, win), lambda n, t: (n, t, 0, 0))
        semantics = ("parallel", "parallel")
        vmem_bytes = 2 * C_in * win * itemsize + 2 * out_block_bytes

    # Headroom for in-kernel temporaries (xs, h, out, residual) + weights.
    vmem_bytes += 8 * C_out * tile_t * 4 + (4 << 20)
    vmem_limit = int(min(48 << 20, max(16 << 20, vmem_bytes)))

    out = pl.pallas_call(
        kernel,
        out_shape=jax.ShapeDtypeStruct((N, C_out, t_pad), x_nct.dtype),
        grid_spec=pltpu.PrefetchScalarGridSpec(
            num_scalar_prefetch=0,
            grid=(N, num_t),
            in_specs=[x_spec] + w_specs,
            out_specs=pl.BlockSpec((None, C_out, tile_t), lambda n, t: (n, 0, t)),
        ),
        compiler_params=pltpu.CompilerParams(
            dimension_semantics=semantics,
            vmem_limit_bytes=vmem_limit),
    )(x_arg, wd, bd, w1, b1)

    return out[:, :, :T]


def _reference(x, w_dil, b_dil, w_1x1, b_1x1, dilation):
    """Plain-JAX reference matching PyTorch Conv1d semantics (eval mode)."""
    out = jax.lax.conv_general_dilated(
        x, w_dil, window_strides=(1,), padding=[(dilation, dilation)],
        rhs_dilation=(dilation,), dimension_numbers=("NCH", "OIH", "NCH"))
    out = out + b_dil[None, :, None]
    out = jnp.maximum(out, 0.0)
    out = jax.lax.conv_general_dilated(
        out, w_1x1, window_strides=(1,), padding=[(0, 0)],
        dimension_numbers=("NCH", "OIH", "NCH"))
    out = out + b_1x1[None, :, None]
    return out + x


def _make_params(key, C, K):
    kw1, kb1, kw2, kb2 = jax.random.split(key, 4)
    bound_d = 1.0 / (C * K) ** 0.5
    w_dil = jax.random.uniform(kw1, (C, C, K), jnp.float32, -bound_d, bound_d)
    b_dil = jax.random.uniform(kb1, (C,), jnp.float32, -bound_d, bound_d)
    bound_1 = 1.0 / (C * 1) ** 0.5
    w_1x1 = jax.random.uniform(kw2, (C, C, 1), jnp.float32, -bound_1, bound_1)
    b_1x1 = jax.random.uniform(kb2, (C,), jnp.float32, -bound_1, bound_1)
    return w_dil, b_dil, w_1x1, b_1x1


if __name__ == "__main__":
    key = jax.random.PRNGKey(0)
    kp, kx1, kx2 = jax.random.split(key, 3)

    # --- Test 1: small shapes, single time tile (d_in == d_out for residual) --
    N, C, T, K, dilation = 2, 16, 16, 3, 2
    w_dil, b_dil, w_1x1, b_1x1 = _make_params(kp, C, K)
    x = jax.random.normal(kx1, (N, C, T), dtype=jnp.float32)
    y_ref = _reference(x, w_dil, b_dil, w_1x1, b_1x1, dilation)

    # Exact-precision path (f32 matmuls) — tight tolerance vs. reference.
    y32 = jax.block_until_ready(dilated_residual_layer(
        x, w_dil, b_dil, w_1x1, b_1x1, dilation=dilation,
        compute_dtype=jnp.float32))
    assert y32.shape == (N, C, T)
    assert jnp.allclose(y32, y_ref, atol=1e-4, rtol=1e-4), "f32 kernel mismatch"

    # Fast path (bf16 matmuls, f32 accumulation) — loosened tolerance.
    ybf = jax.block_until_ready(dilated_residual_layer(
        x, w_dil, b_dil, w_1x1, b_1x1, dilation=dilation,
        compute_dtype=jnp.bfloat16))
    assert ybf.shape == (N, C, T)
    assert jnp.allclose(ybf, y_ref, atol=3e-2, rtol=3e-2), "bf16 kernel mismatch"

    # --- Test 2: longer sequence -> exercises multi-tile resident path --------
    N2, T2, dil2 = 1, 2600, 4
    x2 = jax.random.normal(kx2, (N2, C, T2), dtype=jnp.float32)
    y2_ref = _reference(x2, w_dil, b_dil, w_1x1, b_1x1, dil2)
    y2 = jax.block_until_ready(dilated_residual_layer(
        x2, w_dil, b_dil, w_1x1, b_1x1, dilation=dil2,
        compute_dtype=jnp.float32))
    assert y2.shape == (N2, C, T2)
    assert jnp.allclose(y2, y2_ref, atol=1e-4, rtol=1e-4), "tiled kernel mismatch"

    print("KERNEL_OK")
</pallas_src>

<mosaic_0001>
module attributes {stable_mosaic.version = 11 : i64} {
  func.func @_resident_kernel(%arg0: i32, %arg1: i32, %arg2: memref<1x16x20xf32, #tpu.memory_space<vmem>>, %arg3: memref<16x48xf32, #tpu.memory_space<vmem>>, %arg4: memref<16x1xf32, #tpu.memory_space<vmem>>, %arg5: memref<16x16xf32, #tpu.memory_space<vmem>>, %arg6: memref<16x1xf32, #tpu.memory_space<vmem>>, %arg7: memref<1x16x16xf32, #tpu.memory_space<vmem>>) attributes {dimension_semantics = [#tpu.dimension_semantics<parallel>, #tpu.dimension_semantics<arbitrary>], iteration_bounds = array<i64: 2, 1>, scalar_prefetch = 0 : i64, scratch_operands = 0 : i64, tpu.core_type = #tpu.core_type<tc>, window_params = [{transform_indices = @transform_0, window_bounds = array<i64: 1, 16, 20>}, {pipeline_mode = #tpu.pipeline_mode<synchronous>, transform_indices = @transform_1, window_bounds = array<i64: 16, 48>}, {pipeline_mode = #tpu.pipeline_mode<synchronous>, transform_indices = @transform_2, window_bounds = array<i64: 16, 1>}, {pipeline_mode = #tpu.pipeline_mode<synchronous>, transform_indices = @transform_3, window_bounds = array<i64: 16, 16>}, {pipeline_mode = #tpu.pipeline_mode<synchronous>, transform_indices = @transform_4, window_bounds = array<i64: 16, 1>}, {transform_indices = @transform_5, window_bounds = array<i64: 1, 16, 16>}]} {
    %c0 = arith.constant 0 : index
    %c0_0 = arith.constant 0 : index
    %c0_1 = arith.constant 0 : index
    %0 = vector.load %arg2[%c0, %c0_0, %c0_1] : memref<1x16x20xf32, #tpu.memory_space<vmem>>, vector<1x16x20xf32>
    %1 = vector.shape_cast %0 : vector<1x16x20xf32> to vector<16x20xf32>
    %c0_2 = arith.constant 0 : index
    %c0_3 = arith.constant 0 : index
    %2 = vector.load %arg3[%c0_2, %c0_3] : memref<16x48xf32, #tpu.memory_space<vmem>>, vector<16x48xf32>
    %c0_4 = arith.constant 0 : index
    %c0_5 = arith.constant 0 : index
    %3 = vector.load %arg4[%c0_4, %c0_5] : memref<16x1xf32, #tpu.memory_space<vmem>>, vector<16x1xf32>
    %c0_6 = arith.constant 0 : index
    %c0_7 = arith.constant 0 : index
    %4 = vector.load %arg5[%c0_6, %c0_7] : memref<16x16xf32, #tpu.memory_space<vmem>>, vector<16x16xf32>
    %c0_8 = arith.constant 0 : index
    %c0_9 = arith.constant 0 : index
    %5 = vector.load %arg6[%c0_8, %c0_9] : memref<16x1xf32, #tpu.memory_space<vmem>>, vector<16x1xf32>
    %6 = vector.extract_strided_slice %1 {offsets = [0, 0], sizes = [16, 16], strides = [1, 1]} : vector<16x20xf32> to vector<16x16xf32>
    %7 = vector.extract_strided_slice %1 {offsets = [0, 2], sizes = [16, 16], strides = [1, 1]} : vector<16x20xf32> to vector<16x16xf32>
    %8 = vector.extract_strided_slice %1 {offsets = [0, 4], sizes = [16, 16], strides = [1, 1]} : vector<16x20xf32> to vector<16x16xf32>
    %9 = tpu.concatenate %6, %7, %8 in 0 : vector<16x16xf32>, vector<16x16xf32>, vector<16x16xf32> -> vector<48x16xf32>
    %cst = arith.constant dense<0.000000e+00> : vector<16x16xf32>
    %10 = tpu.matmul %2, %9, %cst {dimension_numbers = #tpu.dot_dimension_numbers<[1], [0], [0], [1], [0, 0, 1, 1], [], []>} : vector<16x48xf32>, vector<48x16xf32>, vector<16x16xf32> -> vector<16x16xf32>
    %11 = vector.broadcast %3 : vector<16x1xf32> to vector<16x16xf32>
    %12 = arith.addf %10, %11 : vector<16x16xf32>
    %cst_10 = arith.constant 0.000000e+00 : f32
    %13 = vector.broadcast %cst_10 : f32 to vector<16x16xf32>
    %14 = arith.maximumf %12, %13 : vector<16x16xf32>
    %cst_11 = arith.constant dense<0.000000e+00> : vector<16x16xf32>
    %15 = tpu.matmul %4, %14, %cst_11 {dimension_numbers = #tpu.dot_dimension_numbers<[1], [0], [0], [1], [0, 0, 1, 1], [], []>} : vector<16x16xf32>, vector<16x16xf32>, vector<16x16xf32> -> vector<16x16xf32>
    %16 = vector.broadcast %5 : vector<16x1xf32> to vector<16x16xf32>
    %17 = arith.addf %15, %16 : vector<16x16xf32>
    %18 = vector.extract_strided_slice %1 {offsets = [0, 2], sizes = [16, 16], strides = [1, 1]} : vector<16x20xf32> to vector<16x16xf32>
    %19 = arith.addf %17, %18 : vector<16x16xf32>
    %c0_12 = arith.constant 0 : index
    %c0_13 = arith.constant 0 : index
    %c0_14 = arith.constant 0 : index
    %20 = vector.load %arg7[%c0_12, %c0_13, %c0_14] : memref<1x16x16xf32, #tpu.memory_space<vmem>>, vector<1x16x16xf32>
    %21 = vector.shape_cast %20 : vector<1x16x16xf32> to vector<16x16xf32>
    %22 = vector.shape_cast %19 : vector<16x16xf32> to vector<1x16x16xf32>
    tpu.vector_store %arg7[%c0_12, %c0_13, %c0_14], %22 {strides = array<i32>} : memref<1x16x16xf32, #tpu.memory_space<vmem>>, vector<1x16x16xf32>,
    return
  }
  func.func @transform_0(%arg0: i32, %arg1: i32) -> (i32, i32, i32) {
    %c0_i32 = arith.constant 0 : i32
    %c0_i32_0 = arith.constant 0 : i32
    %c0_i32_1 = arith.constant 0 : i32
    return %arg0, %c0_i32, %c0_i32_0 : i32, i32, i32
  }
  func.func @transform_1(%arg0: i32, %arg1: i32) -> (i32, i32) {
    %c0_i32 = arith.constant 0 : i32
    %c0_i32_0 = arith.constant 0 : i32
    %c0_i32_1 = arith.constant 0 : i32
    return %c0_i32, %c0_i32_0 : i32, i32
  }
  func.func @transform_2(%arg0: i32, %arg1: i32) -> (i32, i32) {
    %c0_i32 = arith.constant 0 : i32
    %c0_i32_0 = arith.constant 0 : i32
    %c0_i32_1 = arith.constant 0 : i32
    return %c0_i32, %c0_i32_0 : i32, i32
  }
  func.func @transform_3(%arg0: i32, %arg1: i32) -> (i32, i32) {
    %c0_i32 = arith.constant 0 : i32
    %c0_i32_0 = arith.constant 0 : i32
    %c0_i32_1 = arith.constant 0 : i32
    return %c0_i32, %c0_i32_0 : i32, i32
  }
  func.func @transform_4(%arg0: i32, %arg1: i32) -> (i32, i32) {
    %c0_i32 = arith.constant 0 : i32
    %c0_i32_0 = arith.constant 0 : i32
    %c0_i32_1 = arith.constant 0 : i32
    return %c0_i32, %c0_i32_0 : i32, i32
  }
  func.func @transform_5(%arg0: i32, %arg1: i32) -> (i32, i32, i32) {
    %c0_i32 = arith.constant 0 : i32
    %c0_i32_0 = arith.constant 0 : i32
    return %arg0, %c0_i32, %arg1 : i32, i32, i32
  }
}

</mosaic_0001>

<llo_original>
// kernel: tpu_custom_call.1
$region0: #{tpu_custom_call.1}
  #allocation0 [shape = 'u32[]', space=smem, size = 0x4, offset = 0x4, fixed_abs, tag = 'smem constant byte address 0x4 - core index']
  #allocation1 [shape = 'u32[144,128]{1,0:T(1,128)}', space=vmem, size = 0x12000, scoped, tag = 'internal scratch']
  %s0 = inlined_call_operand.vmem [shape: f32[2,16,20], index: 0, kind: input, shape index: {}]
  %s1 = inlined_call_operand.hbm [shape: f32[16,48], index: 1, kind: input, shape index: {}]
  %s2 = inlined_call_operand.vmem [shape: f32[16,1], index: 2, kind: input, shape index: {}]
  %s3 = inlined_call_operand.hbm [shape: f32[16,16], index: 3, kind: input, shape index: {}]
  %s4 = inlined_call_operand.vmem [shape: f32[16,1], index: 4, kind: input, shape index: {}]
  %s5 = inlined_call_operand.hbm [shape: f32[2,16,16], index: 5, kind: output, shape index: {}]
  %s6 = sld [smem:[#allocation0]]
  $region61: #{tpu_custom_call.1} parent=0
    _
  %s8 = ssub.s32 1, %s6
  %s9 = scalar_select 0, %s8, %s6
  $region1: #{tpu_custom_call.1} parent=0
    #allocation2 [shape = 'u8[8192]{0}', space=vmem, size = 0x2000, scoped, tag = 'input window, operand 1, single buffered']
    #allocation3 [shape = 's32[2]{0}', space=sflag, size = 0x8, scoped, tag = 'scoped memory for tpu_custom_call.1']
    #allocation4 [shape = 's32[2]{0}', space=sflag, size = 0x8, scoped, tag = 'scoped memory for tpu_custom_call.1']
    #allocation5 [shape = 'u8[8192]{0}', space=vmem, size = 0x2000, scoped, tag = 'input window, operand 3, single buffered']
    #allocation6 [shape = 's32[1]{0}', space=sflag, size = 0x4, scoped, tag = 'scoped memory for tpu_custom_call.1']
    #allocation7 [shape = 'u8[16384]{0}', space=vmem, size = 0x4000, scoped, tag = 'output window, operand 0']
    %10 = vsyncpa [#allocation3], 0
    %11 = vsyncpa [#allocation6], 0
    %12 = vsyncpa [#allocation4], 0
    %s13 = scalar_lea.sflag [#allocation4], 1
    %14 = vsyncpa %s13, 0
    loop: start=0, step=1, limit=4
    $region2: #{tpu_custom_call.1} parent=1 // loop_pre_header
      _
    $region3: #{tpu_custom_call.1} parent=1 // loop_header
      %s16 = sphi 0, %s20
      %p17 = scmp.ge.s32.totalorder %s16, 4
      %s23 = sphi 0, %s35
      %s24 = sphi 0, %s31
      %s25 = sphi 0, %s23
      %s26 = sphi 0, %s24
      %s27 = sphi 0, %s25
      %s28 = sphi 0, %s26
      %s38 = sphi 0, %s40
      %s41 = sphi 0, %s38
      %s42 = sphi 0, %s41
      %s58 = sphi 0, %s42
      %s62 = sphi 0, %s62
      %s64 = sphi 0, %s62
      %s65 = sphi 0, %s64
      %s79 = sphi 0, %s65
      %s83 = sphi 0, %s83
      %s85 = sphi 0, %s83
      %s86 = sphi 0, %s85
      %s100 = sphi 0, %s86
      %s104 = sphi 0, %s104
      %s106 = sphi 0, %s104
      %s107 = sphi 0, %s106
      %s121 = sphi 0, %s107
      %s125 = sphi 0, %s125
      %s127 = sphi 0, %s125
      %s128 = sphi 0, %s127
      %s142 = sphi 0, %s128
      %s150 = sphi 0, %s152
      %s153 = sphi 0, %s150
      %s154 = sphi 0, %s153
      %s170 = sphi 0, %s154
    $region4: #{tpu_custom_call.1} parent=1 // loop_header_branch
      %19 = sbr.rel (%p17) target = $region8
    $region5: #{tpu_custom_call.1} parent=1 // loop_body
      %s21 = ssub.s32 %s16, 1
      %s22 = ssub.s32 %s16, 2
      %s29 = sadd.s32 1, %s24
      %p30 = scmp.ge.s32.totalorder %s29, 1
      %s31 = scalar_select %p30, 0, %s29
      %s32 = sadd.s32 1, %s23
      %s33 = scalar_select %p30, %s32, %s23
      %p34 = scmp.ge.s32.totalorder %s33, 2
      %s35 = scalar_select %p34, 0, %s33
      %s36 = ssub.s32 %s23, %s35
      %p37 = scmp.eq.s32.totalorder %s36, 0
      %s39 = sadd.s32 %s38, 1
      %s40 = scalar_select %p37, %s38, %s39
      %p43 = pneg %p37
      %p44 = scmp.eq.s32.totalorder %s16, 1
      %p45 = por %p43, %p44
      %p46 = scmp.ne.s32.totalorder %s38, %s41
      %p47 = scmp.eq.s32.totalorder %s16, 0
      %p48 = por %p46, %p47
      %p49 = scmp.ne.s32.totalorder %s38, %s41
      %p50 = scmp.eq.s32.totalorder %s21, 1
      %p51 = por %p49, %p50
      %p52 = scmp.ne.s32.totalorder %s41, %s42
      %p53 = scmp.eq.s32.totalorder %s21, 0
      %p54 = por %p52, %p53
      %p55 = scmp.ne.s32.totalorder %s41, %s42
      %p56 = scmp.eq.s32.totalorder %s22, 1
      %p57 = por %p55, %p56
      %p59 = scmp.ne.s32.totalorder %s42, %s58
      %p60 = scmp.eq.s32.totalorder %s22, 0
      %p61 = por %p59, %p60
      %s63 = sadd.s32 %s62, 1
      %p66 = scmp.eq.s32.totalorder %s16, 1
      %p67 = scmp.ne.s32.totalorder %s62, %s64
      %p68 = scmp.eq.s32.totalorder %s16, 0
      %p69 = por %p67, %p68
      %p70 = scmp.ne.s32.totalorder %s62, %s64
      %p71 = scmp.eq.s32.totalorder %s21, 1
      %p72 = por %p70, %p71
      %p73 = scmp.ne.s32.totalorder %s64, %s65
      %p74 = scmp.eq.s32.totalorder %s21, 0
      %p75 = por %p73, %p74
      %p76 = scmp.ne.s32.totalorder %s64, %s65
      %p77 = scmp.eq.s32.totalorder %s22, 1
      %p78 = por %p76, %p77
      %p80 = scmp.ne.s32.totalorder %s65, %s79
      %p81 = scmp.eq.s32.totalorder %s22, 0
      %p82 = por %p80, %p81
      %s84 = sadd.s32 %s83, 1
      %p87 = scmp.eq.s32.totalorder %s16, 1
      %p88 = scmp.ne.s32.totalorder %s83, %s85
      %p89 = scmp.eq.s32.totalorder %s16, 0
      %p90 = por %p88, %p89
      %p91 = scmp.ne.s32.totalorder %s83, %s85
      %p92 = scmp.eq.s32.totalorder %s21, 1
      %p93 = por %p91, %p92
      %p94 = scmp.ne.s32.totalorder %s85, %s86
      %p95 = scmp.eq.s32.totalorder %s21, 0
      %p96 = por %p94, %p95
      %p97 = scmp.ne.s32.totalorder %s85, %s86
      %p98 = scmp.eq.s32.totalorder %s22, 1
      %p99 = por %p97, %p98
      %p101 = scmp.ne.s32.totalorder %s86, %s100
      %p102 = scmp.eq.s32.totalorder %s22, 0
      %p103 = por %p101, %p102
      %s105 = sadd.s32 %s104, 1
      %p108 = scmp.eq.s32.totalorder %s16, 1
      %p109 = scmp.ne.s32.totalorder %s104, %s106
      %p110 = scmp.eq.s32.totalorder %s16, 0
      %p111 = por %p109, %p110
      %p112 = scmp.ne.s32.totalorder %s104, %s106
      %p113 = scmp.eq.s32.totalorder %s21, 1
      %p114 = por %p112, %p113
      %p115 = scmp.ne.s32.totalorder %s106, %s107
      %p116 = scmp.eq.s32.totalorder %s21, 0
      %p117 = por %p115, %p116
      %p118 = scmp.ne.s32.totalorder %s106, %s107
      %p119 = scmp.eq.s32.totalorder %s22, 1
      %p120 = por %p118, %p119
      %p122 = scmp.ne.s32.totalorder %s107, %s121
      %p123 = scmp.eq.s32.totalorder %s22, 0
      %p124 = por %p122, %p123
      %s126 = sadd.s32 %s125, 1
      %p129 = scmp.eq.s32.totalorder %s16, 1
      %p130 = scmp.ne.s32.totalorder %s125, %s127
      %p131 = scmp.eq.s32.totalorder %s16, 0
      %p132 = por %p130, %p131
      %p133 = scmp.ne.s32.totalorder %s125, %s127
      %p134 = scmp.eq.s32.totalorder %s21, 1
      %p135 = por %p133, %p134
      %p136 = scmp.ne.s32.totalorder %s127, %s128
      %p137 = scmp.eq.s32.totalorder %s21, 0
      %p138 = por %p136, %p137
      %p139 = scmp.ne.s32.totalorder %s127, %s128
      %p140 = scmp.eq.s32.totalorder %s22, 1
      %p141 = por %p139, %p140
      %p143 = scmp.ne.s32.totalorder %s128, %s142
      %p144 = scmp.eq.s32.totalorder %s22, 0
      %p145 = por %p143, %p144
      %s146 = ssub.s32 %s23, %s35
      %s147 = ssub.s32 %s24, %s31
      %s148 = sor.u32 %s146, %s147
      %p149 = scmp.eq.s32.totalorder %s148, 0
      %s151 = sadd.s32 %s150, 1
      %s152 = scalar_select %p149, %s150, %s151
      %p155 = pneg %p149
      %p156 = scmp.eq.s32.totalorder %s16, 1
      %p157 = por %p155, %p156
      %p158 = scmp.ne.s32.totalorder %s150, %s153
      %p159 = scmp.eq.s32.totalorder %s16, 0
      %p160 = por %p158, %p159
      %p161 = scmp.ne.s32.totalorder %s150, %s153
      %p162 = scmp.eq.s32.totalorder %s21, 1
      %p163 = por %p161, %p162
      %p164 = scmp.ne.s32.totalorder %s153, %s154
      %p165 = scmp.eq.s32.totalorder %s21, 0
      %p166 = por %p164, %p165
      %p167 = scmp.ne.s32.totalorder %s153, %s154
      %p168 = scmp.eq.s32.totalorder %s22, 1
      %p169 = por %p167, %p168
      %p171 = scmp.ne.s32.totalorder %s154, %s170
      %p172 = scmp.eq.s32.totalorder %s22, 0
      %p173 = por %p171, %p172
      %p174 = scmp.le.s32.totalorder 1, %s16
      %p175 = scmp.lt.s32.totalorder %s16, 3
      %p176 = pnand %p174, %p175
      %p177 = pneg %p176
      // Predicated region
      $region9: #{tpu_custom_call.1} parent=5 // pred_check
        _
      $region10: #{tpu_custom_call.1} parent=5 // pred_check_branch
        %179 = sbr.rel (%p176) target = $region12
      $region11: #{tpu_custom_call.1} parent=5 // pred_region
        %s180 = ssub.s32 %s16, 1
        // Predicated region
        $region13: #{tpu_custom_call.1} parent=11 // pred_check
          %p181 = pneg %p75
        $region14: #{tpu_custom_call.1} parent=11 // pred_check_branch
          %183 = sbr.rel (%p181) target = $region16
        $region15: #{tpu_custom_call.1} parent=11 // pred_region
          %s185 = ssub.s32 256, 256
          %186 = vsyncadd [#allocation3], %s185
          %s187 = sshll.u32 [#allocation2], 4
          %s188 = int_to_ptr.vmem [resolvable:$true] %s187
          %193 = dma.hbm_to_vmem [thread:$0]  %s1, 256, %s188, [#allocation3], 128, 128, 8
        $region16: #{tpu_custom_call.1} parent=11 // pred_fallthru
          _
        // Predicated region
        $region17: #{tpu_custom_call.1} parent=11 // pred_check
          %p194 = pneg %p96
        $region18: #{tpu_custom_call.1} parent=11 // pred_check_branch
          %196 = sbr.rel (%p194) target = $region20
        $region19: #{tpu_custom_call.1} parent=11 // pred_region
          _
        $region20: #{tpu_custom_call.1} parent=11 // pred_fallthru
          _
        // Predicated region
        $region21: #{tpu_custom_call.1} parent=11 // pred_check
          %p197 = pneg %p117
        $region22: #{tpu_custom_call.1} parent=11 // pred_check_branch
          %199 = sbr.rel (%p197) target = $region24
        $region23: #{tpu_custom_call.1} parent=11 // pred_region
          %s201 = ssub.s32 256, 256
          %202 = vsyncadd [#allocation6], %s201
          %s203 = sshll.u32 [#allocation5], 4
          %s204 = int_to_ptr.vmem [resolvable:$true] %s203
          %209 = dma.hbm_to_vmem [thread:$0]  %s3, 256, %s204, [#allocation6], 128, 128, 8
        $region24: #{tpu_custom_call.1} parent=11 // pred_fallthru
          _
        // Predicated region
        $region25: #{tpu_custom_call.1} parent=11 // pred_check
          %p210 = pneg %p138
        $region26: #{tpu_custom_call.1} parent=11 // pred_check_branch
          %212 = sbr.rel (%p210) target = $region28
        $region27: #{tpu_custom_call.1} parent=11 // pred_region
          _
        $region28: #{tpu_custom_call.1} parent=11 // pred_fallthru
          _
      $region12: #{tpu_custom_call.1} parent=5 // pred_fallthru
        _
      %p213 = scmp.lt.s32.totalorder %s16, 2
      // Predicated region
      $region29: #{tpu_custom_call.1} parent=5 // pred_check
        %p214 = pneg %p213
      $region30: #{tpu_custom_call.1} parent=5 // pred_check_branch
        %216 = sbr.rel (%p214) target = $region32
      $region31: #{tpu_custom_call.1} parent=5 // pred_region
        // Predicated region
        $region33: #{tpu_custom_call.1} parent=31 // pred_check
          %p217 = pneg %p48
        $region34: #{tpu_custom_call.1} parent=31 // pred_check_branch
          %219 = sbr.rel (%p217) target = $region36
        $region35: #{tpu_custom_call.1} parent=31 // pred_region
          %p220 = scmp.lt.s32.totalorder %s23, 1
          %s221 = scalar_select %p220, %s23, 1
          %s222 = smul.addr %s221, 2
          %s223 = smul.addr %s222, 8
          %s224 = scalar_lea.vmem %s0, %s223
        $region36: #{tpu_custom_call.1} parent=31 // pred_fallthru
          _
      $region32: #{tpu_custom_call.1} parent=5 // pred_fallthru
        _
      %p225 = scmp.le.s32.totalorder 1, %s16
      %p226 = scmp.lt.s32.totalorder %s16, 3
      %p227 = pnand %p225, %p226
      %p228 = pneg %p227
      // Predicated region
      $region37: #{tpu_custom_call.1} parent=5 // pred_check
        _
      $region38: #{tpu_custom_call.1} parent=5 // pred_check_branch
        %230 = sbr.rel (%p227) target = $region40
      $region39: #{tpu_custom_call.1} parent=5 // pred_region
        %s231 = ssub.s32 %s16, 1
        // Predicated region
        $region41: #{tpu_custom_call.1} parent=39 // pred_check
          %p232 = pneg %p75
        $region42: #{tpu_custom_call.1} parent=39 // pred_check_branch
          %234 = sbr.rel (%p232) target = $region44
        $region43: #{tpu_custom_call.1} parent=39 // pred_region
          %235 = dma.done [#allocation3], 256
        $region44: #{tpu_custom_call.1} parent=39 // pred_fallthru
          _
        // Predicated region
        $region45: #{tpu_custom_call.1} parent=39 // pred_check
          %p236 = pneg %p117
        $region46: #{tpu_custom_call.1} parent=39 // pred_check_branch
          %238 = sbr.rel (%p236) target = $region48
        $region47: #{tpu_custom_call.1} parent=39 // pred_region
          %239 = dma.done [#allocation6], 256
        $region48: #{tpu_custom_call.1} parent=39 // pred_fallthru
          _
        %p240 = scmp.lt.s32.totalorder %s25, 1
        %s241 = scalar_select %p240, %s25, 1
        %s242 = smul.addr %s241, 2
        %s243 = smul.addr %s242, 8
        %s244 = scalar_lea.vmem %s0, %s243
        %p245 = pneg %p54
        %p246 = pneg %p51
        %p247 = pneg %p75
        %p248 = pneg %p72
        %p249 = pneg %p96
        %p250 = pneg %p93
        %p251 = pneg %p117
        %p252 = pneg %p114
        %p253 = pneg %p138
        %p254 = pneg %p135
        %p255 = pneg %p166
        %p256 = pneg %p163
        %s257 = sand.u32 %s153, 1
        %s258 = scalar_lea.sflag [#allocation4], %s257
        %s259 = sand.u32 %s153, 1
        %s260 = smul.addr %s259, 16
        %s261 = scalar_lea.vmem [#allocation7], %s260
        %p262 = scmp.lt.s32.totalorder %s25, 1
        %s263 = scalar_select %p262, %s25, 1
        %s264 = smul.addr %s263, 2
        %s265 = smul.addr %s264, 8
        %s266 = scalar_lea.vmem %s0, %s265
        %v267 = vld [vmem:[%s266] sm:$0xff]
        %v268 = vld [vmem:[%s266 + $0x8] sm:$0xff]
        %v269 = vld [vmem:[#allocation2] sm:$0xff]
        %v270 = vld [vmem:[#allocation2 + $0x8] sm:$0xff]
        %v271 = vld [vmem:[%s2] sm:$0xff]
        %v272 = vld [vmem:[%s2 + $0x8] sm:$0xff]
        %v273 = vld [vmem:[#allocation5] sm:$0xff]
        %v274 = vld [vmem:[#allocation5 + $0x8] sm:$0xff]
        %v275 = vld [vmem:[%s4] sm:$0xff]
        %v276 = vld [vmem:[%s4 + $0x8] sm:$0xff]
        %279 = vrot.lane.b32.xlu0 %v267, 126
        %v280 = vpop.permute.xlu0 %279
        %281 = vrot.lane.b32.xlu0 %v268, 126
        %v282 = vpop.permute.xlu0 %281
        %285 = vrot.lane.b32.xlu0 %v267, 124
        %v286 = vpop.permute.xlu0 %285
        %287 = vrot.lane.b32.xlu0 %v268, 124
        %v288 = vpop.permute.xlu0 %287
        %292 = vset.pattern.permute.xlu0 0
        %293 = vperm.xlu0 %292, %v271
        %v294 = vpop.permute.xlu0 %293
        %297 = vset.pattern.permute.xlu0 0
        %298 = vperm.xlu0 %297, %v272
        %v299 = vpop.permute.xlu0 %298
        %vm301 = vcmask 392192
        %v303 = vsel %vm301, %v269, 0
        %v306 = vsel %vm301, %v270, 0
        %308 = vmatprep.subr.mxu0 0.0
        %309 = vmatpush1.msra.mxu0 0.0
        %310 = vmatprep.subr.mxu0 0.0
        %311 = vmatpush1.msra.mxu0 0.0
        %312 = vmatprep.subr.mxu0 0.0
        %313 = vmatpush1.msra.mxu0 0.0
        %314 = vmatprep.subr.mxu0 0.0
        %315 = vmatpush1.msra.mxu0 0.0
        %316 = vmatprep.subr.mxu0 0.0
        %317 = vmatpush1.msra.mxu0 0.0
        %318 = vmatprep.subr.mxu0 0.0
        %319 = vmatpush1.msra.mxu0 0.0
        %320 = vmatprep.subr.mxu0 0.0
        %321 = vmatpush1.msra.mxu0 0.0
        %322 = vmatprep.subr.mxu0 0.0
        %323 = vmatpush1.msra.mxu0 0.0
        %324 = vmatprep.subr.mxu0 0.0
        %325 = vmatpush1.msra.mxu0 0.0
        %326 = vmatprep.subr.mxu0 0.0
        %327 = vmatpush1.msra.mxu0 0.0
        %328 = vmatprep.subr.mxu0 0.0
        %329 = vmatpush1.msra.mxu0 %v288
        %330 = vmatprep.subr.mxu0 0.0
        %331 = vmatpush1.msra.mxu0 %v286
        %332 = vmatprep.subr.mxu0 0.0
        %333 = vmatpush1.msra.mxu0 %v282
        %334 = vmatprep.subr.mxu0 0.0
        %335 = vmatpush1.msra.mxu0 %v280
        %336 = vmatprep.subr.mxu0 0.0
        %337 = vmatpush1.msra.mxu0 %v268
        %338 = vmatprep.subr.mxu0 0.0
        %339 = vmatpush1.msra.mxu0 %v267
        %340 = vmatprep.subr.mxu0 0.0
        %341 = vmatpush2.msra.mxu0 0.0
        %342 = vmatprep.subr.mxu0 0.0
        %343 = vmatpush2.msra.mxu0 0.0
        %344 = vmatprep.subr.mxu0 0.0
        %345 = vmatpush2.msra.mxu0 0.0
        %346 = vmatprep.subr.mxu0 0.0
        %347 = vmatpush2.msra.mxu0 0.0
        %348 = vmatprep.subr.mxu0 0.0
        %349 = vmatpush2.msra.mxu0 0.0
        %350 = vmatprep.subr.mxu0 0.0
        %351 = vmatpush2.msra.mxu0 0.0
        %352 = vmatprep.subr.mxu0 0.0
        %353 = vmatpush2.msra.mxu0 0.0
        %354 = vmatprep.subr.mxu0 0.0
        %355 = vmatpush2.msra.mxu0 0.0
        %356 = vmatprep.subr.mxu0 0.0
        %357 = vmatpush2.msra.mxu0 0.0
        %358 = vmatprep.subr.mxu0 0.0
        %359 = vmatpush2.msra.mxu0 0.0
        %360 = vmatprep.subr.mxu0 0.0
        %361 = vmatpush2.msra.mxu0 0.0
        %362 = vmatprep.subr.mxu0 0.0
        %363 = vmatpush2.msra.mxu0 0.0
        %364 = vmatprep.subr.mxu0 0.0
        %365 = vmatpush2.msra.mxu0 0.0
        %366 = vmatprep.subr.mxu0 0.0
        %367 = vmatpush2.msra.mxu0 0.0
        %368 = vmatprep.subr.mxu0 0.0
        %369 = vmatpush2.msra.mxu0 0.0
        %370 = vmatprep.subr.mxu0 0.0
        %371 = vmatpush2.msra.mxu0 0.0
        %372 = vmatprep.mubr.f32.mxu0 0.0
        %373 = vmatmul.mubr.f32.gmra.mxu0 %v303
        %v374 = vpop.f32.mrf.mxu0
        %v375 = vadd.f32 %v294, %v374
        %v376 = vpop.f32.mrf.mxu0
        %377 = vmatprep.mubr.f32.mxu0 0.0
        %378 = vmatmul.mubr.f32.gmra.mxu0 %v306
        %v379 = vpop.f32.mrf.mxu0
        %v380 = vadd.f32 %v299, %v379
        %v381 = vpop.f32.mrf.mxu0
        %382 = vdwg.mxu0
        %v383 = vmax.f32 %v375, 0.0
        %v384 = vmax.f32 %v380, 0.0
        %386 = vset.pattern.permute.xlu0 0
        %387 = vperm.xlu0 %386, %v275
        %v388 = vpop.permute.xlu0 %387
        %391 = vset.pattern.permute.xlu0 0
        %392 = vperm.xlu0 %391, %v276
        %v393 = vpop.permute.xlu0 %392
        %vm395 = vcmask 130048
        %v397 = vsel %vm395, %v273, 0
        %v400 = vsel %vm395, %v274, 0
        %402 = vmatprep.subr.mxu0 0.0
        %403 = vmatpush1.msra.mxu0 0.0
        %404 = vmatprep.subr.mxu0 0.0
        %405 = vmatpush1.msra.mxu0 0.0
        %406 = vmatprep.subr.mxu0 0.0
        %407 = vmatpush1.msra.mxu0 0.0
        %408 = vmatprep.subr.mxu0 0.0
        %409 = vmatpush1.msra.mxu0 0.0
        %410 = vmatprep.subr.mxu0 0.0
        %411 = vmatpush1.msra.mxu0 0.0
        %412 = vmatprep.subr.mxu0 0.0
        %413 = vmatpush1.msra.mxu0 0.0
        %414 = vmatprep.subr.mxu0 0.0
        %415 = vmatpush1.msra.mxu0 0.0
        %416 = vmatprep.subr.mxu0 0.0
        %417 = vmatpush1.msra.mxu0 0.0
        %418 = vmatprep.subr.mxu0 0.0
        %419 = vmatpush1.msra.mxu0 0.0
        %420 = vmatprep.subr.mxu0 0.0
        %421 = vmatpush1.msra.mxu0 0.0
        %422 = vmatprep.subr.mxu0 0.0
        %423 = vmatpush1.msra.mxu0 0.0
        %424 = vmatprep.subr.mxu0 0.0
        %425 = vmatpush1.msra.mxu0 0.0
        %426 = vmatprep.subr.mxu0 0.0
        %427 = vmatpush1.msra.mxu0 0.0
        %428 = vmatprep.subr.mxu0 0.0
        %429 = vmatpush1.msra.mxu0 0.0
        %430 = vmatprep.subr.mxu0 0.0
        %431 = vmatpush1.msra.mxu0 %v384
        %432 = vmatprep.subr.mxu0 0.0
        %433 = vmatpush1.msra.mxu0 %v383
        %434 = vmatprep.subr.mxu0 0.0
        %435 = vmatpush2.msra.mxu0 0.0
        %436 = vmatprep.subr.mxu0 0.0
        %437 = vmatpush2.msra.mxu0 0.0
        %438 = vmatprep.subr.mxu0 0.0
        %439 = vmatpush2.msra.mxu0 0.0
        %440 = vmatprep.subr.mxu0 0.0
        %441 = vmatpush2.msra.mxu0 0.0
        %442 = vmatprep.subr.mxu0 0.0
        %443 = vmatpush2.msra.mxu0 0.0
        %444 = vmatprep.subr.mxu0 0.0
        %445 = vmatpush2.msra.mxu0 0.0
        %446 = vmatprep.subr.mxu0 0.0
        %447 = vmatpush2.msra.mxu0 0.0
        %448 = vmatprep.subr.mxu0 0.0
        %449 = vmatpush2.msra.mxu0 0.0
        %450 = vmatprep.subr.mxu0 0.0
        %451 = vmatpush2.msra.mxu0 0.0
        %452 = vmatprep.subr.mxu0 0.0
        %453 = vmatpush2.msra.mxu0 0.0
        %454 = vmatprep.subr.mxu0 0.0
        %455 = vmatpush2.msra.mxu0 0.0
        %456 = vmatprep.subr.mxu0 0.0
        %457 = vmatpush2.msra.mxu0 0.0
        %458 = vmatprep.subr.mxu0 0.0
        %459 = vmatpush2.msra.mxu0 0.0
        %460 = vmatprep.subr.mxu0 0.0
        %461 = vmatpush2.msra.mxu0 0.0
        %462 = vmatprep.subr.mxu0 0.0
        %463 = vmatpush2.msra.mxu0 0.0
        %464 = vmatprep.subr.mxu0 0.0
        %465 = vmatpush2.msra.mxu0 0.0
        %466 = vmatprep.mubr.f32.mxu0 0.0
        %467 = vmatmul.mubr.f32.gmra.mxu0 %v397
        %v468 = vpop.f32.mrf.mxu0
        %v469 = vadd.f32 %v388, %v468
        %v470 = vpop.f32.mrf.mxu0
        %471 = vmatprep.mubr.f32.mxu0 0.0
        %472 = vmatmul.mubr.f32.gmra.mxu0 %v400
        %v473 = vpop.f32.mrf.mxu0
        %v474 = vadd.f32 %v393, %v473
        %v475 = vpop.f32.mrf.mxu0
        %476 = vdwg.mxu0
        %v477 = vadd.f32 %v469, %v280
        %v478 = vadd.f32 %v474, %v282
        %479 = vst.msk [vmem:[%s261] sm:$0xff] %vm395, %v477
        %480 = vst.msk [vmem:[%s261 + $0x8] sm:$0xff] %vm395, %v478
        %s481 = sand.u32 %s153, 1
        %s482 = scalar_lea.sflag [#allocation4], %s481
        %s483 = sand.u32 %s153, 1
        %s484 = smul.addr %s483, 16
        %s485 = scalar_lea.vmem [#allocation7], %s484
        // Predicated region
        $region49: #{tpu_custom_call.1} parent=39 // pred_check
          %p486 = pneg %p163
        $region50: #{tpu_custom_call.1} parent=39 // pred_check_branch
          %488 = sbr.rel (%p486) target = $region52
        $region51: #{tpu_custom_call.1} parent=39 // pred_region
          %s490 = ssub.s32 256, 256
          %491 = vsyncadd %s482, %s490
          %s492 = smul.addr %s25, 2
          %s493 = sadd.s32 %s26, %s492
          %s494 = smul.addr %s493, 128
          %s495 = scalar_lea.hbm %s5, %s494
          %s496 = sshll.u32 %s485, 4
          %s497 = int_to_ptr.vmem [resolvable:$true] %s496
          %502 = dma.vmem_to_hbm [thread:$0]  %s497, 256, %s495, %s482, 128, 128, 8
        $region52: #{tpu_custom_call.1} parent=39 // pred_fallthru
          _
      $region40: #{tpu_custom_call.1} parent=5 // pred_fallthru
        _
      %p503 = scmp.le.s32.totalorder 2, %s16
      // Predicated region
      $region53: #{tpu_custom_call.1} parent=5 // pred_check
        %p504 = pneg %p503
      $region54: #{tpu_custom_call.1} parent=5 // pred_check_branch
        %506 = sbr.rel (%p504) target = $region56
      $region55: #{tpu_custom_call.1} parent=5 // pred_region
        %s507 = ssub.s32 %s16, 2
        // Predicated region
        $region57: #{tpu_custom_call.1} parent=55 // pred_check
          %p508 = pneg %p169
        $region58: #{tpu_custom_call.1} parent=55 // pred_check_branch
          %510 = sbr.rel (%p508) target = $region60
        $region59: #{tpu_custom_call.1} parent=55 // pred_region
          %s511 = sand.u32 %s154, 1
          %s512 = scalar_lea.sflag [#allocation4], %s511
          %s513 = sand.u32 %s154, 1
          %s514 = smul.addr %s513, 16
          %s515 = scalar_lea.vmem [#allocation7], %s514
          %516 = dma.done %s512, 256
        $region60: #{tpu_custom_call.1} parent=55 // pred_fallthru
          _
      $region56: #{tpu_custom_call.1} parent=5 // pred_fallthru
        _
    $region6: #{tpu_custom_call.1} parent=1 // loop_footer
      %s20 = sadd.s32 1, %s16
    $region7: #{tpu_custom_call.1} parent=1 // loop_footer_branch
      %15 = sbr.rel target = $region3
    $region8: #{tpu_custom_call.1} parent=1 // loop_exit
      _
    %517 = vsyncpa [#allocation3], 1
    %s518 = scalar_lea.sflag [#allocation3], 1
    %519 = vsyncpa %s518, 1
    %520 = vsyncpa [#allocation6], 1
    %521 = vsyncpa [#allocation4], 1
    %s522 = scalar_lea.sflag [#allocation4], 1
    %523 = vsyncpa %s522, 1

</llo_original>
